<compile_context>
chip_gen: v5e
topology: v5e:2x2
jax: 0.10.0
libtpu: 0.0.40
codegen_flags: <defaults>
</compile_context>

<pallas_src>
import jax
import jax.numpy as jnp
from jax.experimental import pallas as pl
from jax.experimental.pallas import tpu as pltpu


def _answer_kernel(q_ref, m_ref, wq_ref, wm_ref, b_ref, o_ref):
    # q_ref, m_ref: (TB, D) VMEM tiles; wq_ref, wm_ref: (1, D) VMEM (grid-resident);
    # b_ref: (1,) SMEM scalar; o_ref: (TB, 1) VMEM output tile.
    q = q_ref[...]
    m = m_ref[...]
    wq = wq_ref[...]          # (1, D) broadcasts over the batch rows
    wm = wm_ref[...]

    # Elementwise multiply in the input dtype (VPU), accumulate in f32, and do a
    # single fused cross-lane reduction (XLU) instead of two separate ones.
    prod = (q * wq).astype(jnp.float32) + (m * wm).astype(jnp.float32)   # (TB, D)
    score = jnp.sum(prod, axis=-1, keepdims=True) + b_ref[0]             # (TB, 1)
    o_ref[...] = score.astype(o_ref.dtype)


def _pick_block_b(batch, d, itemsize):
    """Largest batch tile whose double-buffered q+m footprint stays ~<= 24 MiB."""
    budget = 24 * 1024 * 1024          # leaves headroom under v7x's 64 MiB VMEM
    tb = budget // (2 * 2 * d * itemsize)   # 2 inputs x 2 pipeline buffers
    tb = max(8, min(int(tb), 2048))         # diminishing returns past ~512-1024 rows
    return (tb // 8) * 8                    # sublane alignment


def answer_module_forward(queries, memories, weight, bias, *, block_b=None):
    """queries, memories: (B, rep_dim); weight: (1, 2*rep_dim); bias: (1,)."""
    B, D = queries.shape
    assert memories.shape == (B, D)
    assert weight.shape == (1, 2 * D)

    w_q = weight[:, :D]                           # (1, D)
    w_m = weight[:, D:]                           # (1, D)
    b = bias.reshape((1,)).astype(jnp.float32)    # SMEM scalar
    out_dtype = queries.dtype

    if block_b is None:
        block_b = _pick_block_b(B, D, queries.dtype.itemsize)
    if B <= block_b:
        # Single full-array block: no (8,128) divisibility constraint applies.
        block_b = B
    else:
        block_b = max(8, (block_b // 8) * 8)      # sublane-aligned batch tile

    num_tiles = pl.cdiv(B, block_b)
    b_pad = num_tiles * block_b                   # padded output rows (trimmed below)

    out = pl.pallas_call(
        _answer_kernel,
        out_shape=jax.ShapeDtypeStruct((b_pad, 1), out_dtype),
        grid=(num_tiles,),
        in_specs=[
            pl.BlockSpec((block_b, D), lambda i: (i, 0)),                 # queries
            pl.BlockSpec((block_b, D), lambda i: (i, 0)),                 # memories
            pl.BlockSpec((1, D), lambda i: (0, 0)),                       # w_q (resident)
            pl.BlockSpec((1, D), lambda i: (0, 0)),                       # w_m (resident)
            pl.BlockSpec(memory_space=pltpu.MemorySpace.SMEM),            # bias scalar
        ],
        out_specs=pl.BlockSpec((block_b, 1), lambda i: (i, 0)),
        compiler_params=pltpu.CompilerParams(
            dimension_semantics=("parallel",),    # batch tiles independent -> megacore
            vmem_limit_bytes=48 * 1024 * 1024,
        ),
    )(queries, memories, w_q, w_m, b)

    # Trim rows coming from a ragged last batch tile (their inputs are undefined
    # out-of-bounds reads and must be discarded).
    return out[:B]


def _reference(queries, memories, weight, bias):
    x = jnp.concatenate([queries, memories], axis=1)
    return jnp.dot(x, weight.T, precision=jax.lax.Precision.HIGHEST) + bias[None, :]


if __name__ == "__main__":
    def make_inputs(key, batch, rep_dim):
        kq, km, kw, kb = jax.random.split(key, 4)
        q = jax.random.normal(kq, (batch, rep_dim), dtype=jnp.float32)
        m = jax.random.normal(km, (batch, rep_dim), dtype=jnp.float32)
        # Deterministic Linear(2*rep_dim, 1) init (PyTorch-style uniform bound).
        bound = 1.0 / (2 * rep_dim) ** 0.5
        w = jax.random.uniform(kw, (1, 2 * rep_dim), jnp.float32, -bound, bound)
        b = jax.random.uniform(kb, (1,), jnp.float32, -bound, bound)
        return q, m, w, b

    # 1) Module-sized tiny case (batch=2, rep_dim=32): single full-array block.
    #    (At this size per-call overhead dominates; the kernel exists for large B.)
    q, m, w, b = make_inputs(jax.random.PRNGKey(0), 2, 32)
    out = jax.block_until_ready(answer_module_forward(q, m, w, b))
    ref = _reference(q, m, w, b)
    assert out.shape == (2, 1)
    assert jnp.allclose(out, ref, atol=1e-4, rtol=1e-4), (out, ref)

    # 2) Multi-tile case exercising the pipelined, parallel batch grid (3 steps).
    q, m, w, b = make_inputs(jax.random.PRNGKey(1), 384, 256)
    out = jax.block_until_ready(answer_module_forward(q, m, w, b, block_b=128))
    ref = _reference(q, m, w, b)
    assert out.shape == (384, 1)
    assert jnp.allclose(out, ref, atol=1e-4, rtol=1e-4)

    print("KERNEL_OK")
</pallas_src>

<mosaic_0001>
module attributes {stable_mosaic.version = 11 : i64} {
  func.func @_answer_kernel(%arg0: i32, %arg1: memref<2x32xf32, #tpu.memory_space<vmem>>, %arg2: memref<2x32xf32, #tpu.memory_space<vmem>>, %arg3: memref<1x32xf32, #tpu.memory_space<vmem>>, %arg4: memref<1x32xf32, #tpu.memory_space<vmem>>, %arg5: memref<1xf32, #tpu.memory_space<smem>>, %arg6: memref<2x1xf32, #tpu.memory_space<vmem>>) attributes {dimension_semantics = [#tpu.dimension_semantics<parallel>], iteration_bounds = array<i64: 1>, scalar_prefetch = 0 : i64, scratch_operands = 0 : i64, tpu.core_type = #tpu.core_type<tc>, window_params = [{transform_indices = @transform_0, window_bounds = array<i64: 2, 32>}, {transform_indices = @transform_1, window_bounds = array<i64: 2, 32>}, {pipeline_mode = #tpu.pipeline_mode<synchronous>, transform_indices = @transform_2, window_bounds = array<i64: 1, 32>}, {pipeline_mode = #tpu.pipeline_mode<synchronous>, transform_indices = @transform_3, window_bounds = array<i64: 1, 32>}, {transform_indices = @transform_4, window_bounds = array<i64: 1>}, {transform_indices = @transform_5, window_bounds = array<i64: 2, 1>}]} {
    %c0 = arith.constant 0 : index
    %c0_0 = arith.constant 0 : index
    %0 = vector.load %arg1[%c0, %c0_0] : memref<2x32xf32, #tpu.memory_space<vmem>>, vector<2x32xf32>
    %c0_1 = arith.constant 0 : index
    %c0_2 = arith.constant 0 : index
    %1 = vector.load %arg2[%c0_1, %c0_2] : memref<2x32xf32, #tpu.memory_space<vmem>>, vector<2x32xf32>
    %c0_3 = arith.constant 0 : index
    %c0_4 = arith.constant 0 : index
    %2 = vector.load %arg3[%c0_3, %c0_4] : memref<1x32xf32, #tpu.memory_space<vmem>>, vector<1x32xf32>
    %c0_5 = arith.constant 0 : index
    %c0_6 = arith.constant 0 : index
    %3 = vector.load %arg4[%c0_5, %c0_6] : memref<1x32xf32, #tpu.memory_space<vmem>>, vector<1x32xf32>
    %4 = vector.broadcast %2 : vector<1x32xf32> to vector<2x32xf32>
    %5 = arith.mulf %0, %4 : vector<2x32xf32>
    %6 = vector.broadcast %3 : vector<1x32xf32> to vector<2x32xf32>
    %7 = arith.mulf %1, %6 : vector<2x32xf32>
    %8 = arith.addf %5, %7 : vector<2x32xf32>
    %cst = arith.constant dense<0.000000e+00> : vector<2xf32>
    %9 = vector.multi_reduction <add>, %8, %cst [1] : vector<2x32xf32> to vector<2xf32>
    %10 = vector.shape_cast %9 : vector<2xf32> to vector<2x1xf32>
    %c0_7 = arith.constant 0 : index
    %11 = memref.load %arg5[%c0_7] : memref<1xf32, #tpu.memory_space<smem>>
    %12 = vector.broadcast %11 : f32 to vector<2x1xf32>
    %13 = arith.addf %10, %12 : vector<2x1xf32>
    %c0_8 = arith.constant 0 : index
    %c0_9 = arith.constant 0 : index
    %14 = vector.load %arg6[%c0_8, %c0_9] : memref<2x1xf32, #tpu.memory_space<vmem>>, vector<2x1xf32>
    tpu.vector_store %arg6[%c0_8, %c0_9], %13 {strides = array<i32>} : memref<2x1xf32, #tpu.memory_space<vmem>>, vector<2x1xf32>,
    return
  }
  func.func @transform_0(%arg0: i32) -> (i32, i32) {
    %c0_i32 = arith.constant 0 : i32
    %c0_i32_0 = arith.constant 0 : i32
    return %arg0, %c0_i32 : i32, i32
  }
  func.func @transform_1(%arg0: i32) -> (i32, i32) {
    %c0_i32 = arith.constant 0 : i32
    %c0_i32_0 = arith.constant 0 : i32
    return %arg0, %c0_i32 : i32, i32
  }
  func.func @transform_2(%arg0: i32) -> (i32, i32) {
    %c0_i32 = arith.constant 0 : i32
    %c0_i32_0 = arith.constant 0 : i32
    %c0_i32_1 = arith.constant 0 : i32
    return %c0_i32, %c0_i32_0 : i32, i32
  }
  func.func @transform_3(%arg0: i32) -> (i32, i32) {
    %c0_i32 = arith.constant 0 : i32
    %c0_i32_0 = arith.constant 0 : i32
    %c0_i32_1 = arith.constant 0 : i32
    return %c0_i32, %c0_i32_0 : i32, i32
  }
  func.func @transform_4(%arg0: i32) -> i32 {
    %c0_i32 = arith.constant 0 : i32
    %c0_i32_0 = arith.constant 0 : i32
    return %c0_i32 : i32
  }
  func.func @transform_5(%arg0: i32) -> (i32, i32) {
    %c0_i32 = arith.constant 0 : i32
    %c0_i32_0 = arith.constant 0 : i32
    return %arg0, %c0_i32 : i32, i32
  }
}

</mosaic_0001>

<llo_original>
// kernel: tpu_custom_call.1
$region0: #{tpu_custom_call.1}
  #allocation0 [shape = 'u32[]', space=smem, size = 0x4, offset = 0x4, fixed_abs, tag = 'smem constant byte address 0x4 - core index']
  #allocation1 [shape = 'u32[72,128]{1,0:T(1,128)}', space=vmem, size = 0x9000, scoped, tag = 'internal scratch']
  #allocation2 [shape = 'f32[1]{0:T(128)S(6)}', space=smem, size = 0x200, scoped, tag = 'scoped memory for tpu_custom_call.1']
  %s0 = inlined_call_operand.vmem [shape: f32[2,32], index: 0, kind: input, shape index: {}]
  %s1 = inlined_call_operand.hbm [shape: f32[2,32], index: 1, kind: input, shape index: {}]
  %s2 = inlined_call_operand.vmem [shape: f32[1,32], index: 2, kind: input, shape index: {}]
  %s3 = inlined_call_operand.vmem [shape: f32[1,32], index: 3, kind: input, shape index: {}]
  %s4 = inlined_call_operand.<no memory space> [shape: f32[1], index: 4, kind: input, shape index: {}]
  %s5 = inlined_call_operand.vmem [shape: f32[2,1], index: 5, kind: output, shape index: {}]
  %s6 = sld [smem:[#allocation0]]
  $region34: #{tpu_custom_call.1} parent=0
    _
  %s8 = ssub.s32 1, %s6
  %s9 = scalar_select 0, %s8, %s6
  %10 = sst [smem:[#allocation2]] %s4
  $region1: #{tpu_custom_call.1} parent=0
    #allocation3 [shape = 'u8[1024]{0}', space=vmem, size = 0x400, scoped, tag = 'input window, operand 1, single buffered']
    #allocation4 [shape = 's32[1]{0}', space=sflag, size = 0x4, scoped, tag = 'scoped memory for tpu_custom_call.1']
    %11 = vsyncpa [#allocation4], 0
    // Predicated region
    $region2: #{tpu_custom_call.1} parent=1 // pred_check
      _
    $region3: #{tpu_custom_call.1} parent=1 // pred_check_branch
      %13 = sbr.rel (0) target = $region5
    $region4: #{tpu_custom_call.1} parent=1 // pred_region
      _
    $region5: #{tpu_custom_call.1} parent=1 // pred_fallthru
      _
    // Predicated region
    $region6: #{tpu_custom_call.1} parent=1 // pred_check
      _
    $region7: #{tpu_custom_call.1} parent=1 // pred_check_branch
      %15 = sbr.rel (0) target = $region9
    $region8: #{tpu_custom_call.1} parent=1 // pred_region
      %17 = vsyncadd [#allocation4], 0
      %s19 = sshll.u32 %s1, 4
      %s20 = int_to_ptr.hbm [resolvable:$true] %s19
      %s21 = sshll.u32 [#allocation3], 4
      %s22 = int_to_ptr.vmem [resolvable:$true] %s21
      %24 = dma.hbm_to_vmem [thread:$0]  %s20, 32, %s22, [#allocation4]
    $region9: #{tpu_custom_call.1} parent=1 // pred_fallthru
      _
    // Predicated region
    $region10: #{tpu_custom_call.1} parent=1 // pred_check
      _
    $region11: #{tpu_custom_call.1} parent=1 // pred_check_branch
      %26 = sbr.rel (0) target = $region13
    $region12: #{tpu_custom_call.1} parent=1 // pred_region
      _
    $region13: #{tpu_custom_call.1} parent=1 // pred_fallthru
      _
    // Predicated region
    $region14: #{tpu_custom_call.1} parent=1 // pred_check
      _
    $region15: #{tpu_custom_call.1} parent=1 // pred_check_branch
      %28 = sbr.rel (0) target = $region17
    $region16: #{tpu_custom_call.1} parent=1 // pred_region
      _
    $region17: #{tpu_custom_call.1} parent=1 // pred_fallthru
      _
    // Predicated region
    $region18: #{tpu_custom_call.1} parent=1 // pred_check
      _
    $region19: #{tpu_custom_call.1} parent=1 // pred_check_branch
      %30 = sbr.rel (0) target = $region21
    $region20: #{tpu_custom_call.1} parent=1 // pred_region
      _
    $region21: #{tpu_custom_call.1} parent=1 // pred_fallthru
      _
    // Predicated region
    $region22: #{tpu_custom_call.1} parent=1 // pred_check
      _
    $region23: #{tpu_custom_call.1} parent=1 // pred_check_branch
      %32 = sbr.rel (0) target = $region25
    $region24: #{tpu_custom_call.1} parent=1 // pred_region
      %34 = dma.done [#allocation4], 32
    $region25: #{tpu_custom_call.1} parent=1 // pred_fallthru
      _
    %v35 = vld [vmem:[%s0] sm:$0x3]
    %v36 = vld [vmem:[#allocation3] sm:$0x3]
    %v37 = vld [vmem:[%s2] sm:$0x1]
    %v38 = vld [vmem:[%s3] sm:$0x1]
    %v40 = vperm.slane %v37, 0
    %v42 = vmul.f32 %v35, %v40
    %v44 = vperm.slane %v38, 0
    %v46 = vmul.f32 %v36, %v44
    %v47 = vadd.f32 %v42, %v46
    %vm48 = vcmask 254976
    %v49 = vsel %vm48, %v47, 0.0
    %50 = vadd.xlane.f32.xlu0 %v49
    %v51 = vpop.xlane.xlu0 %50
    %s52 = sld [smem:[#allocation2]]
    %v53 = vstv %s52
    %v54 = vadd.f32 %v51, %v53
    %vm55 = vcmask 1024
    %56 = vst.msk [vmem:[%s5] sm:$0x3] %vm55, %v54
    // Predicated region
    $region26: #{tpu_custom_call.1} parent=1 // pred_check
      _
    $region27: #{tpu_custom_call.1} parent=1 // pred_check_branch
      %58 = sbr.rel (0) target = $region29
    $region28: #{tpu_custom_call.1} parent=1 // pred_region
      _
    $region29: #{tpu_custom_call.1} parent=1 // pred_fallthru
      _
    // Predicated region
    $region30: #{tpu_custom_call.1} parent=1 // pred_check
      _
    $region31: #{tpu_custom_call.1} parent=1 // pred_check_branch
      %60 = sbr.rel (0) target = $region33
    $region32: #{tpu_custom_call.1} parent=1 // pred_region
      _
    $region33: #{tpu_custom_call.1} parent=1 // pred_fallthru
      _
    %61 = vsyncpa [#allocation4], 1

</llo_original>
